<compile_context>
chip_gen: v6e
topology: v6e:2x2x1
jax: 0.10.0
libtpu: 0.0.40
codegen_flags: <defaults>
</compile_context>

<pallas_src>
import jax
import jax.numpy as jnp
from jax import lax
from jax.experimental import pallas as pl
from jax.experimental.pallas import tpu as pltpu

LN_EPS = 1e-5

_DEF_TILE_R = 512
_DEF_TILE_N = 512


def _round_up(x, m):
    return ((x + m - 1) // m) * m


def _row_align(dtype):
    # Sublane packing of the second-minor dim: f32 -> 8 rows, bf16 -> 16, int8/fp8 -> 32.
    return max(8, 32 // max(jnp.dtype(dtype).itemsize, 1))


def _pick_tile_r(R, dtype, tile_r_max=_DEF_TILE_R, min_steps=4, tile_r_floor=256):
    """Largest row tile <= tile_r_max that keeps >= min_steps grid steps (feeds both
    v7x TensorCores), but never below a ~256-row floor (per-step overhead ~0.35us)."""
    align = _row_align(dtype)
    tile_r_max = max(align, (tile_r_max // align) * align)
    floor = min(max(align, (tile_r_floor // align) * align),
                _round_up(R, align), tile_r_max)
    per_step = _round_up(pl.cdiv(R, min_steps), align)
    return max(floor, min(tile_r_max, per_step))


def _pick_tile_n(H, tile_n_max=_DEF_TILE_N):
    """H tile: full H when small; otherwise a lane-aligned (multiple-of-128) tile so
    output stores stay unmasked. Ragged final tiles are handled by masked edge stores."""
    if H <= tile_n_max:
        return H
    return max(128, (tile_n_max // 128) * 128)


def prenorm_linear_kernel(x_ref, g_ref, b_ref, w_ref, wb_ref, o_ref, y_ref):
    # x_ref: (TR, D)   g_ref/b_ref: (1, D)   w_ref: (D, TN)   wb_ref: (1, TN)
    # o_ref: (TR, TN)  y_ref (VMEM scratch): (TR, D) in the matmul dtype.

    # LayerNorm once per row tile; the x block index is constant across the N axis so
    # Pallas does not re-DMA it, and the normalized tile is reused from scratch.
    @pl.when(pl.program_id(1) == 0)
    def _():
        x = x_ref[...].astype(jnp.float32)
        # One-pass stats: sum(x) and sum(x*x) reductions issue back-to-back on the XLU.
        mean = jnp.mean(x, axis=-1, keepdims=True)
        mean_sq = jnp.mean(x * x, axis=-1, keepdims=True)
        var = mean_sq - mean * mean                      # biased variance (torch LN)
        xn = (x - mean) * lax.rsqrt(var + LN_EPS)        # eps inside rsqrt (torch LN)
        y = xn * g_ref[...].astype(jnp.float32) + b_ref[...].astype(jnp.float32)
        y_ref[...] = y.astype(y_ref.dtype)

    # fn := Linear(dim, hidden). Operands kept in the weight dtype (bf16 models hit the
    # bf16 MXU rate); accumulate in f32 on the MXU.
    out = jnp.dot(y_ref[...], w_ref[...], preferred_element_type=jnp.float32)
    out = out + wb_ref[...].astype(jnp.float32)
    o_ref[...] = out.astype(o_ref.dtype)


def prenorm(x, gamma, beta, w, wb, *, tile_r=_DEF_TILE_R, tile_n=_DEF_TILE_N):
    """PreNorm with fn = Linear: x (B, S, D) -> (B, S, H), H = w.shape[1]."""
    B, S, D = x.shape
    H = w.shape[1]
    R = B * S
    xf = x.reshape(R, D)

    tr = _pick_tile_r(R, x.dtype, tile_r)
    tn = _pick_tile_n(H, tile_n)
    grid = (pl.cdiv(R, tr), pl.cdiv(H, tn))

    x_b = jnp.dtype(x.dtype).itemsize
    w_b = jnp.dtype(w.dtype).itemsize
    o_b = jnp.dtype(x.dtype).itemsize

    # Advisory cost estimate: matmul + LN elementwise flops, rsqrt per row, and the
    # real byte streams (W is re-streamed once per row tile when N is tiled).
    cost = pl.CostEstimate(
        flops=int(2 * R * D * H + 8 * R * D),
        transcendentals=int(R),
        bytes_accessed=int(R * D * x_b + grid[0] * D * H * w_b + R * H * o_b
                           + 2 * D * 4 + H * 4),
    )

    # Explicit scoped-VMEM budget: double-buffered x / W / out tiles + LN scratch +
    # small params, with 1.5x headroom, capped at 64 MiB (v7x physical VMEM).
    vmem_needed = (2 * tr * D * x_b + 2 * D * tn * w_b + 2 * tr * tn * o_b
                   + tr * D * w_b + 4 * D * 4 + 2 * tn * 4)
    vmem_limit = min(max(int(1.5 * vmem_needed) + (2 << 20), 32 << 20), 64 << 20)

    out = pl.pallas_call(
        prenorm_linear_kernel,
        out_shape=jax.ShapeDtypeStruct((R, H), x.dtype),
        grid_spec=pltpu.PrefetchScalarGridSpec(
            num_scalar_prefetch=0,
            grid=grid,
            in_specs=[
                pl.BlockSpec((tr, D), lambda i, j: (i, 0)),   # x rows (revisited over j)
                pl.BlockSpec((1, D), lambda i, j: (0, 0)),    # LayerNorm gamma
                pl.BlockSpec((1, D), lambda i, j: (0, 0)),    # LayerNorm beta
                pl.BlockSpec((D, tn), lambda i, j: (0, j)),   # Linear weight column tile
                pl.BlockSpec((1, tn), lambda i, j: (0, j)),   # Linear bias tile
            ],
            out_specs=pl.BlockSpec((tr, tn), lambda i, j: (i, j)),
            scratch_shapes=[pltpu.VMEM((tr, D), w.dtype)],    # normalized rows, reused over j
        ),
        compiler_params=pltpu.CompilerParams(
            # Row tiles are independent -> shard across TensorCores (2 TCs on v7x);
            # the N axis carries the LN scratch, so it stays "arbitrary".
            dimension_semantics=("parallel", "arbitrary"),
            vmem_limit_bytes=vmem_limit,
        ),
        cost_estimate=cost,
    )(xf, gamma.reshape(1, D), beta.reshape(1, D), w, wb.reshape(1, H))

    return out.reshape(B, S, H)


def reference(x, gamma, beta, w, wb):
    xf = x.astype(jnp.float32)
    mean = jnp.mean(xf, axis=-1, keepdims=True)
    var = jnp.mean((xf - mean) ** 2, axis=-1, keepdims=True)
    xn = (xf - mean) * lax.rsqrt(var + LN_EPS)
    y = xn * gamma.astype(jnp.float32) + beta.astype(jnp.float32)
    out = jnp.dot(y, w.astype(jnp.float32)) + wb.astype(jnp.float32)
    return out.astype(x.dtype)


if __name__ == "__main__":
    # TODO(synk): PreNorm.fn is a generic callable; this kernel fuses the Linear case.
    key = jax.random.PRNGKey(0)
    kx, kg, kb, kw, kwb, kx2 = jax.random.split(key, 6)

    D, H = 128, 256
    gamma = 1.0 + 0.1 * jax.random.normal(kg, (D,), dtype=jnp.float32)
    beta = 0.1 * jax.random.normal(kb, (D,), dtype=jnp.float32)
    w = jax.random.normal(kw, (D, H), dtype=jnp.float32) * (1.0 / jnp.sqrt(D))
    wb = 0.01 * jax.random.normal(kwb, (H,), dtype=jnp.float32)

    # Config 1: lane-dense shapes, default (auto) tiling: R=512 -> tile_r=256, 2 row steps.
    B, S = 2, 256
    x = jax.random.normal(kx, (B, S, D), dtype=jnp.float32)
    out = jax.block_until_ready(prenorm(x, gamma, beta, w, wb))
    ref = reference(x, gamma, beta, w, wb)
    assert out.shape == (B, S, H)
    assert jnp.max(jnp.abs(out - ref)) < 2e-3, "mismatch vs reference (config 1)"

    # Config 2: ragged row count + explicit N tiling -> exercises the LN-scratch reuse
    # across H tiles and the masked edge stores (no wrapper-side pad/slice copies).
    B2, S2 = 2, 200  # R = 400, not a multiple of the 128-row tile
    x2 = jax.random.normal(kx2, (B2, S2, D), dtype=jnp.float32)
    out2 = jax.block_until_ready(
        prenorm(x2, gamma, beta, w, wb, tile_r=128, tile_n=128))
    ref2 = reference(x2, gamma, beta, w, wb)
    assert out2.shape == (B2, S2, H)
    assert jnp.max(jnp.abs(out2 - ref2)) < 2e-3, "mismatch vs reference (config 2)"

    print("KERNEL_OK")
</pallas_src>

<mosaic_0001>
module attributes {stable_mosaic.version = 11 : i64} {
  func.func @prenorm_linear_kernel(%arg0: i32, %arg1: i32, %arg2: memref<256x128xf32, #tpu.memory_space<vmem>>, %arg3: memref<1x128xf32, #tpu.memory_space<vmem>>, %arg4: memref<1x128xf32, #tpu.memory_space<vmem>>, %arg5: memref<128x256xf32, #tpu.memory_space<vmem>>, %arg6: memref<1x256xf32, #tpu.memory_space<vmem>>, %arg7: memref<256x256xf32, #tpu.memory_space<vmem>>, %arg8: memref<256x128xf32, #tpu.memory_space<vmem>>) attributes {dimension_semantics = [#tpu.dimension_semantics<parallel>, #tpu.dimension_semantics<arbitrary>], iteration_bounds = array<i64: 2, 1>, scalar_prefetch = 0 : i64, scratch_operands = 1 : i64, tpu.core_type = #tpu.core_type<tc>, window_params = [{transform_indices = @transform_0, window_bounds = array<i64: 256, 128>}, {pipeline_mode = #tpu.pipeline_mode<synchronous>, transform_indices = @transform_1, window_bounds = array<i64: 1, 128>}, {pipeline_mode = #tpu.pipeline_mode<synchronous>, transform_indices = @transform_2, window_bounds = array<i64: 1, 128>}, {transform_indices = @transform_3, window_bounds = array<i64: 128, 256>}, {transform_indices = @transform_4, window_bounds = array<i64: 1, 256>}, {transform_indices = @transform_5, window_bounds = array<i64: 256, 256>}]} {
    %c0_i32 = arith.constant 0 : i32
    %0 = arith.cmpi eq, %arg1, %c0_i32 : i32
    %1 = arith.extui %0 : i1 to i32
    %c0_i32_0 = arith.constant 0 : i32
    %2 = arith.cmpi ne, %1, %c0_i32_0 : i32
    scf.if %2 {
      %c0_8 = arith.constant 0 : index
      %c0_9 = arith.constant 0 : index
      %10 = vector.load %arg2[%c0_8, %c0_9] : memref<256x128xf32, #tpu.memory_space<vmem>>, vector<256x128xf32>
      %cst_10 = arith.constant dense<0.000000e+00> : vector<256xf32>
      %11 = vector.multi_reduction <add>, %10, %cst_10 [1] : vector<256x128xf32> to vector<256xf32>
      %12 = vector.shape_cast %11 : vector<256xf32> to vector<256x1xf32>
      %cst_11 = arith.constant 1.280000e+02 : f32
      %13 = vector.broadcast %cst_11 : f32 to vector<256x1xf32>
      %14 = arith.divf %12, %13 : vector<256x1xf32>
      %15 = arith.mulf %10, %10 : vector<256x128xf32>
      %cst_12 = arith.constant dense<0.000000e+00> : vector<256xf32>
      %16 = vector.multi_reduction <add>, %15, %cst_12 [1] : vector<256x128xf32> to vector<256xf32>
      %17 = vector.shape_cast %16 : vector<256xf32> to vector<256x1xf32>
      %cst_13 = arith.constant 1.280000e+02 : f32
      %18 = vector.broadcast %cst_13 : f32 to vector<256x1xf32>
      %19 = arith.divf %17, %18 : vector<256x1xf32>
      %20 = arith.mulf %14, %14 : vector<256x1xf32>
      %21 = arith.subf %19, %20 : vector<256x1xf32>
      %22 = vector.broadcast %14 : vector<256x1xf32> to vector<256x128xf32>
      %23 = arith.subf %10, %22 : vector<256x128xf32>
      %cst_14 = arith.constant 9.99999974E-6 : f32
      %24 = vector.broadcast %cst_14 : f32 to vector<256x1xf32>
      %25 = arith.addf %21, %24 : vector<256x1xf32>
      %26 = math.rsqrt %25 : vector<256x1xf32>
      %27 = vector.broadcast %26 : vector<256x1xf32> to vector<256x128xf32>
      %28 = arith.mulf %23, %27 : vector<256x128xf32>
      %c0_15 = arith.constant 0 : index
      %c0_16 = arith.constant 0 : index
      %29 = vector.load %arg3[%c0_15, %c0_16] : memref<1x128xf32, #tpu.memory_space<vmem>>, vector<1x128xf32>
      %30 = vector.broadcast %29 : vector<1x128xf32> to vector<256x128xf32>
      %31 = arith.mulf %28, %30 : vector<256x128xf32>
      %c0_17 = arith.constant 0 : index
      %c0_18 = arith.constant 0 : index
      %32 = vector.load %arg4[%c0_17, %c0_18] : memref<1x128xf32, #tpu.memory_space<vmem>>, vector<1x128xf32>
      %33 = vector.broadcast %32 : vector<1x128xf32> to vector<256x128xf32>
      %34 = arith.addf %31, %33 : vector<256x128xf32>
      %c0_19 = arith.constant 0 : index
      %c0_20 = arith.constant 0 : index
      %35 = vector.load %arg8[%c0_19, %c0_20] : memref<256x128xf32, #tpu.memory_space<vmem>>, vector<256x128xf32>
      tpu.vector_store %arg8[%c0_19, %c0_20], %34 {strides = array<i32>} : memref<256x128xf32, #tpu.memory_space<vmem>>, vector<256x128xf32>,
    } else {
    }
    %c0 = arith.constant 0 : index
    %c0_1 = arith.constant 0 : index
    %3 = vector.load %arg8[%c0, %c0_1] : memref<256x128xf32, #tpu.memory_space<vmem>>, vector<256x128xf32>
    %c0_2 = arith.constant 0 : index
    %c0_3 = arith.constant 0 : index
    %4 = vector.load %arg5[%c0_2, %c0_3] : memref<128x256xf32, #tpu.memory_space<vmem>>, vector<128x256xf32>
    %cst = arith.constant dense<0.000000e+00> : vector<256x256xf32>
    %5 = tpu.matmul %3, %4, %cst {dimension_numbers = #tpu.dot_dimension_numbers<[1], [0], [0], [1], [0, 0, 1, 1], [], []>} : vector<256x128xf32>, vector<128x256xf32>, vector<256x256xf32> -> vector<256x256xf32>
    %c0_4 = arith.constant 0 : index
    %c0_5 = arith.constant 0 : index
    %6 = vector.load %arg6[%c0_4, %c0_5] : memref<1x256xf32, #tpu.memory_space<vmem>>, vector<1x256xf32>
    %7 = vector.broadcast %6 : vector<1x256xf32> to vector<256x256xf32>
    %8 = arith.addf %5, %7 : vector<256x256xf32>
    %c0_6 = arith.constant 0 : index
    %c0_7 = arith.constant 0 : index
    %9 = vector.load %arg7[%c0_6, %c0_7] : memref<256x256xf32, #tpu.memory_space<vmem>>, vector<256x256xf32>
    tpu.vector_store %arg7[%c0_6, %c0_7], %8 {strides = array<i32>} : memref<256x256xf32, #tpu.memory_space<vmem>>, vector<256x256xf32>,
    return
  }
  func.func @transform_0(%arg0: i32, %arg1: i32) -> (i32, i32) {
    %c0_i32 = arith.constant 0 : i32
    %c0_i32_0 = arith.constant 0 : i32
    return %arg0, %c0_i32 : i32, i32
  }
  func.func @transform_1(%arg0: i32, %arg1: i32) -> (i32, i32) {
    %c0_i32 = arith.constant 0 : i32
    %c0_i32_0 = arith.constant 0 : i32
    %c0_i32_1 = arith.constant 0 : i32
    return %c0_i32, %c0_i32_0 : i32, i32
  }
  func.func @transform_2(%arg0: i32, %arg1: i32) -> (i32, i32) {
    %c0_i32 = arith.constant 0 : i32
    %c0_i32_0 = arith.constant 0 : i32
    %c0_i32_1 = arith.constant 0 : i32
    return %c0_i32, %c0_i32_0 : i32, i32
  }
  func.func @transform_3(%arg0: i32, %arg1: i32) -> (i32, i32) {
    %c0_i32 = arith.constant 0 : i32
    %c0_i32_0 = arith.constant 0 : i32
    return %c0_i32, %arg1 : i32, i32
  }
  func.func @transform_4(%arg0: i32, %arg1: i32) -> (i32, i32) {
    %c0_i32 = arith.constant 0 : i32
    %c0_i32_0 = arith.constant 0 : i32
    return %c0_i32, %arg1 : i32, i32
  }
  func.func @transform_5(%arg0: i32, %arg1: i32) -> (i32, i32) {
    %c0_i32 = arith.constant 0 : i32
    return %arg0, %arg1 : i32, i32
  }
}

</mosaic_0001>

<llo_original>
// kernel: tpu_custom_call.1
$region0: #{tpu_custom_call.1}
  #allocation0 [shape = 'u32[]', space=smem, size = 0x4, offset = 0x4, fixed_abs, tag = 'smem constant byte address 0x4 - core index']
  #allocation1 [shape = 'u32[144,128]{1,0:T(1,128)}', space=vmem, size = 0x12000, scoped, tag = 'internal scratch']
  #allocation2 [shape = 'f32[256,128]{1,0:T(8,128)}', space=vmem, size = 0x20000, scoped, tag = 'scratch operand']
  %s0 = inlined_call_operand.hbm [shape: f32[512,128], index: 0, kind: input, shape index: {}]
  %s1 = inlined_call_operand.vmem [shape: f32[1,128], index: 1, kind: input, shape index: {}]
  %s2 = inlined_call_operand.hbm [shape: f32[1,128], index: 2, kind: input, shape index: {}]
  %s3 = inlined_call_operand.hbm [shape: f32[128,256], index: 3, kind: input, shape index: {}]
  %s4 = inlined_call_operand.vmem [shape: f32[1,256], index: 4, kind: input, shape index: {}]
  %s5 = inlined_call_operand.hbm [shape: f32[512,256], index: 5, kind: output, shape index: {}]
  %s6 = sld [smem:[#allocation0]]
  $region69: #{tpu_custom_call.1} parent=0
    _
  %s8 = ssub.s32 1, %s6
  %s9 = scalar_select 0, %s8, %s6
  $region1: #{tpu_custom_call.1} parent=0
    #allocation3 [shape = 'u8[262144]{0}', space=vmem, size = 0x40000, scoped, tag = 'input window, operand 0']
    #allocation4 [shape = 's32[2]{0}', space=sflag, size = 0x8, scoped, tag = 'scoped memory for tpu_custom_call.1']
    #allocation5 [shape = 's32[2]{0}', space=sflag, size = 0x8, scoped, tag = 'scoped memory for tpu_custom_call.1']
    #allocation6 [shape = 'u8[512]{0}', space=vmem, size = 0x400, scoped, tag = 'input window, operand 2, single buffered']
    #allocation7 [shape = 's32[1]{0}', space=sflag, size = 0x4, scoped, tag = 'scoped memory for tpu_custom_call.1']
    #allocation8 [shape = 'u8[131072]{0}', space=vmem, size = 0x20000, scoped, tag = 'input window, operand 3, single buffered']
    #allocation9 [shape = 'u8[524288]{0}', space=vmem, size = 0x80000, scoped, tag = 'output window, operand 0']
    %10 = vsyncpa [#allocation4], 0
    %s11 = scalar_lea.sflag [#allocation4], 1
    %12 = vsyncpa %s11, 0
    %13 = vsyncpa [#allocation7], 0
    %14 = vsyncpa [#allocation5], 0
    %s15 = scalar_lea.sflag [#allocation5], 1
    %16 = vsyncpa %s15, 0
    loop: start=0, step=1, limit=4
    $region2: #{tpu_custom_call.1} parent=1 // loop_pre_header
      _
    $region3: #{tpu_custom_call.1} parent=1 // loop_header
      %s18 = sphi 0, %s22
      %p19 = scmp.ge.s32.totalorder %s18, 4
      %s25 = sphi 0, %s37
      %s26 = sphi 0, %s33
      %s27 = sphi 0, %s25
      %s28 = sphi 0, %s26
      %s29 = sphi 0, %s27
      %s30 = sphi 0, %s28
      %s40 = sphi 0, %s42
      %s43 = sphi 0, %s40
      %s44 = sphi 0, %s43
      %s60 = sphi 0, %s44
      %s64 = sphi 0, %s64
      %s66 = sphi 0, %s64
      %s67 = sphi 0, %s66
      %s81 = sphi 0, %s67
      %s85 = sphi 0, %s85
      %s87 = sphi 0, %s85
      %s88 = sphi 0, %s87
      %s102 = sphi 0, %s88
      %s108 = sphi 0, %s110
      %s111 = sphi 0, %s108
      %s112 = sphi 0, %s111
      %s128 = sphi 0, %s112
      %s134 = sphi 0, %s136
      %s137 = sphi 0, %s134
      %s138 = sphi 0, %s137
      %s154 = sphi 0, %s138
      %s162 = sphi 0, %s164
      %s165 = sphi 0, %s162
      %s166 = sphi 0, %s165
      %s182 = sphi 0, %s166
    $region4: #{tpu_custom_call.1} parent=1 // loop_header_branch
      %21 = sbr.rel (%p19) target = $region8
    $region5: #{tpu_custom_call.1} parent=1 // loop_body
      %s23 = ssub.s32 %s18, 1
      %s24 = ssub.s32 %s18, 2
      %s31 = sadd.s32 1, %s26
      %p32 = scmp.ge.s32.totalorder %s31, 1
      %s33 = scalar_select %p32, 0, %s31
      %s34 = sadd.s32 1, %s25
      %s35 = scalar_select %p32, %s34, %s25
      %p36 = scmp.ge.s32.totalorder %s35, 2
      %s37 = scalar_select %p36, 0, %s35
      %s38 = ssub.s32 %s25, %s37
      %p39 = scmp.eq.s32.totalorder %s38, 0
      %s41 = sadd.s32 %s40, 1
      %s42 = scalar_select %p39, %s40, %s41
      %p45 = pneg %p39
      %p46 = scmp.eq.s32.totalorder %s18, 1
      %p47 = por %p45, %p46
      %p48 = scmp.ne.s32.totalorder %s40, %s43
      %p49 = scmp.eq.s32.totalorder %s18, 0
      %p50 = por %p48, %p49
      %p51 = scmp.ne.s32.totalorder %s40, %s43
      %p52 = scmp.eq.s32.totalorder %s23, 1
      %p53 = por %p51, %p52
      %p54 = scmp.ne.s32.totalorder %s43, %s44
      %p55 = scmp.eq.s32.totalorder %s23, 0
      %p56 = por %p54, %p55
      %p57 = scmp.ne.s32.totalorder %s43, %s44
      %p58 = scmp.eq.s32.totalorder %s24, 1
      %p59 = por %p57, %p58
      %p61 = scmp.ne.s32.totalorder %s44, %s60
      %p62 = scmp.eq.s32.totalorder %s24, 0
      %p63 = por %p61, %p62
      %s65 = sadd.s32 %s64, 1
      %p68 = scmp.eq.s32.totalorder %s18, 1
      %p69 = scmp.ne.s32.totalorder %s64, %s66
      %p70 = scmp.eq.s32.totalorder %s18, 0
      %p71 = por %p69, %p70
      %p72 = scmp.ne.s32.totalorder %s64, %s66
      %p73 = scmp.eq.s32.totalorder %s23, 1
      %p74 = por %p72, %p73
      %p75 = scmp.ne.s32.totalorder %s66, %s67
      %p76 = scmp.eq.s32.totalorder %s23, 0
      %p77 = por %p75, %p76
      %p78 = scmp.ne.s32.totalorder %s66, %s67
      %p79 = scmp.eq.s32.totalorder %s24, 1
      %p80 = por %p78, %p79
      %p82 = scmp.ne.s32.totalorder %s67, %s81
      %p83 = scmp.eq.s32.totalorder %s24, 0
      %p84 = por %p82, %p83
      %s86 = sadd.s32 %s85, 1
      %p89 = scmp.eq.s32.totalorder %s18, 1
      %p90 = scmp.ne.s32.totalorder %s85, %s87
      %p91 = scmp.eq.s32.totalorder %s18, 0
      %p92 = por %p90, %p91
      %p93 = scmp.ne.s32.totalorder %s85, %s87
      %p94 = scmp.eq.s32.totalorder %s23, 1
      %p95 = por %p93, %p94
      %p96 = scmp.ne.s32.totalorder %s87, %s88
      %p97 = scmp.eq.s32.totalorder %s23, 0
      %p98 = por %p96, %p97
      %p99 = scmp.ne.s32.totalorder %s87, %s88
      %p100 = scmp.eq.s32.totalorder %s24, 1
      %p101 = por %p99, %p100
      %p103 = scmp.ne.s32.totalorder %s88, %s102
      %p104 = scmp.eq.s32.totalorder %s24, 0
      %p105 = por %p103, %p104
      %s106 = ssub.s32 %s26, %s33
      %p107 = scmp.eq.s32.totalorder %s106, 0
      %s109 = sadd.s32 %s108, 1
      %s110 = scalar_select %p107, %s108, %s109
      %p113 = pneg %p107
      %p114 = scmp.eq.s32.totalorder %s18, 1
      %p115 = por %p113, %p114
      %p116 = scmp.ne.s32.totalorder %s108, %s111
      %p117 = scmp.eq.s32.totalorder %s18, 0
      %p118 = por %p116, %p117
      %p119 = scmp.ne.s32.totalorder %s108, %s111
      %p120 = scmp.eq.s32.totalorder %s23, 1
      %p121 = por %p119, %p120
      %p122 = scmp.ne.s32.totalorder %s111, %s112
      %p123 = scmp.eq.s32.totalorder %s23, 0
      %p124 = por %p122, %p123
      %p125 = scmp.ne.s32.totalorder %s111, %s112
      %p126 = scmp.eq.s32.totalorder %s24, 1
      %p127 = por %p125, %p126
      %p129 = scmp.ne.s32.totalorder %s112, %s128
      %p130 = scmp.eq.s32.totalorder %s24, 0
      %p131 = por %p129, %p130
      %s132 = ssub.s32 %s26, %s33
      %p133 = scmp.eq.s32.totalorder %s132, 0
      %s135 = sadd.s32 %s134, 1
      %s136 = scalar_select %p133, %s134, %s135
      %p139 = pneg %p133
      %p140 = scmp.eq.s32.totalorder %s18, 1
      %p141 = por %p139, %p140
      %p142 = scmp.ne.s32.totalorder %s134, %s137
      %p143 = scmp.eq.s32.totalorder %s18, 0
      %p144 = por %p142, %p143
      %p145 = scmp.ne.s32.totalorder %s134, %s137
      %p146 = scmp.eq.s32.totalorder %s23, 1
      %p147 = por %p145, %p146
      %p148 = scmp.ne.s32.totalorder %s137, %s138
      %p149 = scmp.eq.s32.totalorder %s23, 0
      %p150 = por %p148, %p149
      %p151 = scmp.ne.s32.totalorder %s137, %s138
      %p152 = scmp.eq.s32.totalorder %s24, 1
      %p153 = por %p151, %p152
      %p155 = scmp.ne.s32.totalorder %s138, %s154
      %p156 = scmp.eq.s32.totalorder %s24, 0
      %p157 = por %p155, %p156
      %s158 = ssub.s32 %s25, %s37
      %s159 = ssub.s32 %s26, %s33
      %s160 = sor.u32 %s158, %s159
      %p161 = scmp.eq.s32.totalorder %s160, 0
      %s163 = sadd.s32 %s162, 1
      %s164 = scalar_select %p161, %s162, %s163
      %p167 = pneg %p161
      %p168 = scmp.eq.s32.totalorder %s18, 1
      %p169 = por %p167, %p168
      %p170 = scmp.ne.s32.totalorder %s162, %s165
      %p171 = scmp.eq.s32.totalorder %s18, 0
      %p172 = por %p170, %p171
      %p173 = scmp.ne.s32.totalorder %s162, %s165
      %p174 = scmp.eq.s32.totalorder %s23, 1
      %p175 = por %p173, %p174
      %p176 = scmp.ne.s32.totalorder %s165, %s166
      %p177 = scmp.eq.s32.totalorder %s23, 0
      %p178 = por %p176, %p177
      %p179 = scmp.ne.s32.totalorder %s165, %s166
      %p180 = scmp.eq.s32.totalorder %s24, 1
      %p181 = por %p179, %p180
      %p183 = scmp.ne.s32.totalorder %s166, %s182
      %p184 = scmp.eq.s32.totalorder %s24, 0
      %p185 = por %p183, %p184
      %p186 = scmp.le.s32.totalorder 1, %s18
      %p187 = scmp.lt.s32.totalorder %s18, 3
      %p188 = pnand %p186, %p187
      %p189 = pneg %p188
      // Predicated region
      $region9: #{tpu_custom_call.1} parent=5 // pred_check
        _
      $region10: #{tpu_custom_call.1} parent=5 // pred_check_branch
        %191 = sbr.rel (%p188) target = $region12
      $region11: #{tpu_custom_call.1} parent=5 // pred_region
        %s192 = ssub.s32 %s18, 1
        // Predicated region
        $region13: #{tpu_custom_call.1} parent=11 // pred_check
          %p193 = pneg %p77
        $region14: #{tpu_custom_call.1} parent=11 // pred_check_branch
          %195 = sbr.rel (%p193) target = $region16
        $region15: #{tpu_custom_call.1} parent=11 // pred_region
          _
        $region16: #{tpu_custom_call.1} parent=11 // pred_fallthru
          _
        // Predicated region
        $region17: #{tpu_custom_call.1} parent=11 // pred_check
          %p196 = pneg %p98
        $region18: #{tpu_custom_call.1} parent=11 // pred_check_branch
          %198 = sbr.rel (%p196) target = $region20
        $region19: #{tpu_custom_call.1} parent=11 // pred_region
          %s200 = ssub.s32 16, 16
          %201 = vsyncadd [#allocation7], %s200
          %s203 = sshll.u32 [#allocation6], 4
          %s204 = int_to_ptr.vmem [resolvable:$true] %s203
          %206 = dma.hbm_to_vmem [thread:$0]  %s2, 16, %s204, [#allocation7]
        $region20: #{tpu_custom_call.1} parent=11 // pred_fallthru
          _
        // Predicated region
        $region21: #{tpu_custom_call.1} parent=11 // pred_check
          %p207 = pneg %p124
        $region22: #{tpu_custom_call.1} parent=11 // pred_check_branch
          %209 = sbr.rel (%p207) target = $region24
        $region23: #{tpu_custom_call.1} parent=11 // pred_region
          %s210 = smul.u32 2, %s28
          %s212 = ssub.s32 4096, 4096
          %213 = vsyncadd [#allocation7], %s212
          %s214 = smul.addr %s210, 128
          %s215 = scalar_lea.hbm %s3, %s214
          %s216 = sshll.u32 [#allocation8], 4
          %s217 = int_to_ptr.vmem [resolvable:$true] %s216
          %222 = dma.hbm_to_vmem [thread:$0]  %s215, 4096, %s217, [#allocation7], 256, 256, 16
        $region24: #{tpu_custom_call.1} parent=11 // pred_fallthru
          _
        // Predicated region
        $region25: #{tpu_custom_call.1} parent=11 // pred_check
          %p223 = pneg %p150
        $region26: #{tpu_custom_call.1} parent=11 // pred_check_branch
          %225 = sbr.rel (%p223) target = $region28
        $region27: #{tpu_custom_call.1} parent=11 // pred_region
          %s226 = smul.u32 2, %s28
          %p227 = scmp.lt.s32.totalorder %s226, 1
          %s228 = scalar_select %p227, %s226, 1
          %s229 = scalar_lea.vmem %s4, %s228
          %s230 = smul.u32 2, %s28
        $region28: #{tpu_custom_call.1} parent=11 // pred_fallthru
          _
      $region12: #{tpu_custom_call.1} parent=5 // pred_fallthru
        _
      %p231 = scmp.lt.s32.totalorder %s18, 2
      // Predicated region
      $region29: #{tpu_custom_call.1} parent=5 // pred_check
        %p232 = pneg %p231
      $region30: #{tpu_custom_call.1} parent=5 // pred_check_branch
        %234 = sbr.rel (%p232) target = $region32
      $region31: #{tpu_custom_call.1} parent=5 // pred_region
        // Predicated region
        $region33: #{tpu_custom_call.1} parent=31 // pred_check
          %p235 = pneg %p50
        $region34: #{tpu_custom_call.1} parent=31 // pred_check_branch
          %237 = sbr.rel (%p235) target = $region36
        $region35: #{tpu_custom_call.1} parent=31 // pred_region
          %s238 = sand.u32 %s40, 1
          %s239 = scalar_lea.sflag [#allocation4], %s238
          %s240 = sand.u32 %s40, 1
          %s241 = smul.addr %s240, 256
          %s242 = scalar_lea.vmem [#allocation3], %s241
          %s243 = smul.u32 32, %s25
          %s245 = ssub.s32 4096, 4096
          %246 = vsyncadd %s239, %s245
          %s247 = smul.addr %s243, 128
          %s248 = scalar_lea.hbm %s0, %s247
          %s249 = sshll.u32 %s242, 4
          %s250 = int_to_ptr.vmem [resolvable:$true] %s249
          %255 = dma.hbm_to_vmem [thread:$0]  %s248, 4096, %s250, %s239, 128, 128, 8
        $region36: #{tpu_custom_call.1} parent=31 // pred_fallthru
          _
      $region32: #{tpu_custom_call.1} parent=5 // pred_fallthru
        _
      %p256 = scmp.le.s32.totalorder 1, %s18
      %p257 = scmp.lt.s32.totalorder %s18, 3
      %p258 = pnand %p256, %p257
      %p259 = pneg %p258
      // Predicated region
      $region37: #{tpu_custom_call.1} parent=5 // pred_check
        _
      $region38: #{tpu_custom_call.1} parent=5 // pred_check_branch
        %261 = sbr.rel (%p258) target = $region40
      $region39: #{tpu_custom_call.1} parent=5 // pred_region
        %s262 = ssub.s32 %s18, 1
        %s263 = sand.u32 %s43, 1
        %s264 = scalar_lea.sflag [#allocation4], %s263
        %s265 = sand.u32 %s43, 1
        %s266 = smul.addr %s265, 256
        %s267 = scalar_lea.vmem [#allocation3], %s266
        // Predicated region
        $region41: #{tpu_custom_call.1} parent=39 // pred_check
          %p268 = pneg %p56
        $region42: #{tpu_custom_call.1} parent=39 // pred_check_branch
          %270 = sbr.rel (%p268) target = $region44
        $region43: #{tpu_custom_call.1} parent=39 // pred_region
          %271 = dma.done %s264, 4096
        $region44: #{tpu_custom_call.1} parent=39 // pred_fallthru
          _
        // Predicated region
        $region45: #{tpu_custom_call.1} parent=39 // pred_check
          %p272 = pneg %p98
        $region46: #{tpu_custom_call.1} parent=39 // pred_check_branch
          %274 = sbr.rel (%p272) target = $region48
        $region47: #{tpu_custom_call.1} parent=39 // pred_region
          %275 = dma.done [#allocation7], 16
        $region48: #{tpu_custom_call.1} parent=39 // pred_fallthru
          _
        // Predicated region
        $region49: #{tpu_custom_call.1} parent=39 // pred_check
          %p276 = pneg %p124
        $region50: #{tpu_custom_call.1} parent=39 // pred_check_branch
          %278 = sbr.rel (%p276) target = $region52
        $region51: #{tpu_custom_call.1} parent=39 // pred_region
          %279 = dma.done [#allocation7], 4096
        $region52: #{tpu_custom_call.1} parent=39 // pred_fallthru
          _
        %s280 = sand.u32 %s43, 1
        %s281 = scalar_lea.sflag [#allocation4], %s280
        %s282 = sand.u32 %s43, 1
        %s283 = smul.addr %s282, 256
        %s284 = scalar_lea.vmem [#allocation3], %s283
        %p285 = pneg %p56
        %p286 = pneg %p53
        %p287 = pneg %p77
        %p288 = pneg %p74
        %p289 = pneg %p98
        %p290 = pneg %p95
        %p291 = pneg %p124
        %p292 = pneg %p121
        %s293 = smul.u32 2, %s28
        %p294 = scmp.lt.s32.totalorder %s293, 1
        %s295 = scalar_select %p294, %s293, 1
        %s296 = scalar_lea.vmem %s4, %s295
        %p297 = pneg %p150
        %p298 = pneg %p147
        %p299 = pneg %p178
        %p300 = pneg %p175
        %s301 = sand.u32 %s165, 1
        %s302 = scalar_lea.sflag [#allocation5], %s301
        %s303 = sand.u32 %s165, 1
        %s304 = smul.addr %s303, 512
        %s305 = scalar_lea.vmem [#allocation9], %s304
        %s306 = smul.u32 32, %s27
        %s307 = smul.u32 2, %s28
        %s308 = smul.u32 2, %s28
        %p309 = scmp.lt.s32.totalorder %s308, 1
        %s310 = scalar_select %p309, %s308, 1
        %s311 = scalar_lea.vmem %s4, %s310
        %s312 = smul.u32 2, %s28
        %s313 = smul.u32 32, %s27
        %s314 = smul.u32 2, %s28
        %p315 = scmp.eq.s32.totalorder %s28, 0
        // Predicated region
        $region53: #{tpu_custom_call.1} parent=39 // pred_check
          %p316 = pneg %p315
        $region54: #{tpu_custom_call.1} parent=39 // pred_check_branch
          %318 = sbr.rel (%p316) target = $region56
        $region55: #{tpu_custom_call.1} parent=39 // pred_region
          %v319 = vld [vmem:[%s267] sm:$0xff]
          %v320 = vld [vmem:[%s267 + $0x8] sm:$0xff]
          %v321 = vld [vmem:[%s267 + $0x10] sm:$0xff]
          %v322 = vld [vmem:[%s267 + $0x18] sm:$0xff]
          %v323 = vld [vmem:[%s267 + $0x20] sm:$0xff]
          %v324 = vld [vmem:[%s267 + $0x28] sm:$0xff]
          %v325 = vld [vmem:[%s267 + $0x30] sm:$0xff]
          %v326 = vld [vmem:[%s267 + $0x38] sm:$0xff]
          %v327 = vld [vmem:[%s267 + $0x40] sm:$0xff]
          %v328 = vld [vmem:[%s267 + $0x48] sm:$0xff]
          %v329 = vld [vmem:[%s267 + $0x50] sm:$0xff]
          %v330 = vld [vmem:[%s267 + $0x58] sm:$0xff]
          %v331 = vld [vmem:[%s267 + $0x60] sm:$0xff]
          %v332 = vld [vmem:[%s267 + $0x68] sm:$0xff]
          %v333 = vld [vmem:[%s267 + $0x70] sm:$0xff]
          %v334 = vld [vmem:[%s267 + $0x78] sm:$0xff]
          %v335 = vld [vmem:[%s267 + $0x80] sm:$0xff]
          %v336 = vld [vmem:[%s267 + $0x88] sm:$0xff]
          %v337 = vld [vmem:[%s267 + $0x90] sm:$0xff]
          %v338 = vld [vmem:[%s267 + $0x98] sm:$0xff]
          %v339 = vld [vmem:[%s267 + $0xa0] sm:$0xff]
          %v340 = vld [vmem:[%s267 + $0xa8] sm:$0xff]
          %v341 = vld [vmem:[%s267 + $0xb0] sm:$0xff]
          %v342 = vld [vmem:[%s267 + $0xb8] sm:$0xff]
          %v343 = vld [vmem:[%s267 + $0xc0] sm:$0xff]
          %v344 = vld [vmem:[%s267 + $0xc8] sm:$0xff]
          %v345 = vld [vmem:[%s267 + $0xd0] sm:$0xff]
          %v346 = vld [vmem:[%s267 + $0xd8] sm:$0xff]
          %v347 = vld [vmem:[%s267 + $0xe0] sm:$0xff]
          %v348 = vld [vmem:[%s267 + $0xe8] sm:$0xff]
          %v349 = vld [vmem:[%s267 + $0xf0] sm:$0xff]
          %v350 = vld [vmem:[%s267 + $0xf8] sm:$0xff]
          %351 = vadd.xlane.f32.xlu0 %v319
          %v352 = vpop.xlane.xlu0 %351
          %353 = vadd.xlane.f32.xlu0 %v320
          %v354 = vpop.xlane.xlu0 %353
          %355 = vadd.xlane.f32.xlu0 %v321
          %v356 = vpop.xlane.xlu0 %355
          %357 = vadd.xlane.f32.xlu0 %v322
          %v358 = vpop.xlane.xlu0 %357
          %359 = vadd.xlane.f32.xlu0 %v323
          %v360 = vpop.xlane.xlu0 %359
          %361 = vadd.xlane.f32.xlu0 %v324
          %v362 = vpop.xlane.xlu0 %361
          %363 = vadd.xlane.f32.xlu0 %v325
          %v364 = vpop.xlane.xlu0 %363
          %365 = vadd.xlane.f32.xlu0 %v326
          %v366 = vpop.xlane.xlu0 %365
          %367 = vadd.xlane.f32.xlu0 %v327
          %v368 = vpop.xlane.xlu0 %367
          %369 = vadd.xlane.f32.xlu0 %v328
          %v370 = vpop.xlane.xlu0 %369
          %371 = vadd.xlane.f32.xlu0 %v329
          %v372 = vpop.xlane.xlu0 %371
          %373 = vadd.xlane.f32.xlu0 %v330
          %v374 = vpop.xlane.xlu0 %373
          %375 = vadd.xlane.f32.xlu0 %v331
          %v376 = vpop.xlane.xlu0 %375
          %377 = vadd.xlane.f32.xlu0 %v332
          %v378 = vpop.xlane.xlu0 %377
          %379 = vadd.xlane.f32.xlu0 %v333
          %v380 = vpop.xlane.xlu0 %379
          %381 = vadd.xlane.f32.xlu0 %v334
          %v382 = vpop.xlane.xlu0 %381
          %383 = vadd.xlane.f32.xlu0 %v335
          %v384 = vpop.xlane.xlu0 %383
          %385 = vadd.xlane.f32.xlu0 %v336
          %v386 = vpop.xlane.xlu0 %385
          %387 = vadd.xlane.f32.xlu0 %v337
          %v388 = vpop.xlane.xlu0 %387
          %389 = vadd.xlane.f32.xlu0 %v338
          %v390 = vpop.xlane.xlu0 %389
          %391 = vadd.xlane.f32.xlu0 %v339
          %v392 = vpop.xlane.xlu0 %391
          %393 = vadd.xlane.f32.xlu0 %v340
          %v394 = vpop.xlane.xlu0 %393
          %395 = vadd.xlane.f32.xlu0 %v341
          %v396 = vpop.xlane.xlu0 %395
          %397 = vadd.xlane.f32.xlu0 %v342
          %v398 = vpop.xlane.xlu0 %397
          %399 = vadd.xlane.f32.xlu0 %v343
          %v400 = vpop.xlane.xlu0 %399
          %401 = vadd.xlane.f32.xlu0 %v344
          %v402 = vpop.xlane.xlu0 %401
          %403 = vadd.xlane.f32.xlu0 %v345
          %v404 = vpop.xlane.xlu0 %403
          %405 = vadd.xlane.f32.xlu0 %v346
          %v406 = vpop.xlane.xlu0 %405
          %407 = vadd.xlane.f32.xlu0 %v347
          %v408 = vpop.xlane.xlu0 %407
          %409 = vadd.xlane.f32.xlu0 %v348
          %v410 = vpop.xlane.xlu0 %409
          %411 = vadd.xlane.f32.xlu0 %v349
          %v412 = vpop.xlane.xlu0 %411
          %413 = vadd.xlane.f32.xlu0 %v350
          %v414 = vpop.xlane.xlu0 %413
          %v415 = vrcp.pop 128.0
          %v416 = vmul.f32 %v352, %v415
          %v417 = vmul.f32 %v354, %v415
          %v418 = vmul.f32 %v356, %v415
          %v419 = vmul.f32 %v358, %v415
          %v420 = vmul.f32 %v360, %v415
          %v421 = vmul.f32 %v362, %v415
          %v422 = vmul.f32 %v364, %v415
          %v423 = vmul.f32 %v366, %v415
          %v424 = vmul.f32 %v368, %v415
          %v425 = vmul.f32 %v370, %v415
          %v426 = vmul.f32 %v372, %v415
          %v427 = vmul.f32 %v374, %v415
          %v428 = vmul.f32 %v376, %v415
          %v429 = vmul.f32 %v378, %v415
          %v430 = vmul.f32 %v380, %v415
          %v431 = vmul.f32 %v382, %v415
          %v432 = vmul.f32 %v384, %v415
          %v433 = vmul.f32 %v386, %v415
          %v434 = vmul.f32 %v388, %v415
          %v435 = vmul.f32 %v390, %v415
          %v436 = vmul.f32 %v392, %v415
          %v437 = vmul.f32 %v394, %v415
          %v438 = vmul.f32 %v396, %v415
          %v439 = vmul.f32 %v398, %v415
          %v440 = vmul.f32 %v400, %v415
          %v441 = vmul.f32 %v402, %v415
          %v442 = vmul.f32 %v404, %v415
          %v443 = vmul.f32 %v406, %v415
          %v444 = vmul.f32 %v408, %v415
          %v445 = vmul.f32 %v410, %v415
          %v446 = vmul.f32 %v412, %v415
          %v447 = vmul.f32 %v414, %v415
          %v448 = vmul.f32 %v319, %v319
          %v449 = vmul.f32 %v320, %v320
          %v450 = vmul.f32 %v321, %v321
          %v451 = vmul.f32 %v322, %v322
          %v452 = vmul.f32 %v323, %v323
          %v453 = vmul.f32 %v324, %v324
          %v454 = vmul.f32 %v325, %v325
          %v455 = vmul.f32 %v326, %v326
          %v456 = vmul.f32 %v327, %v327
          %v457 = vmul.f32 %v328, %v328
          %v458 = vmul.f32 %v329, %v329
          %v459 = vmul.f32 %v330, %v330
          %v460 = vmul.f32 %v331, %v331
          %v461 = vmul.f32 %v332, %v332
          %v462 = vmul.f32 %v333, %v333
          %v463 = vmul.f32 %v334, %v334
          %v464 = vmul.f32 %v335, %v335
          %v465 = vmul.f32 %v336, %v336
          %v466 = vmul.f32 %v337, %v337
          %v467 = vmul.f32 %v338, %v338
          %v468 = vmul.f32 %v339, %v339
          %v469 = vmul.f32 %v340, %v340
          %v470 = vmul.f32 %v341, %v341
          %v471 = vmul.f32 %v342, %v342
          %v472 = vmul.f32 %v343, %v343
          %v473 = vmul.f32 %v344, %v344
          %v474 = vmul.f32 %v345, %v345
          %v475 = vmul.f32 %v346, %v346
          %v476 = vmul.f32 %v347, %v347
          %v477 = vmul.f32 %v348, %v348
          %v478 = vmul.f32 %v349, %v349
          %v479 = vmul.f32 %v350, %v350
          %480 = vadd.xlane.f32.xlu0 %v448
          %v481 = vpop.xlane.xlu0 %480
          %482 = vadd.xlane.f32.xlu0 %v449
          %v483 = vpop.xlane.xlu0 %482
          %484 = vadd.xlane.f32.xlu0 %v450
          %v485 = vpop.xlane.xlu0 %484
          %486 = vadd.xlane.f32.xlu0 %v451
          %v487 = vpop.xlane.xlu0 %486
          %488 = vadd.xlane.f32.xlu0 %v452
          %v489 = vpop.xlane.xlu0 %488
          %490 = vadd.xlane.f32.xlu0 %v453
          %v491 = vpop.xlane.xlu0 %490
          %492 = vadd.xlane.f32.xlu0 %v454
          %v493 = vpop.xlane.xlu0 %492
          %494 = vadd.xlane.f32.xlu0 %v455
          %v495 = vpop.xlane.xlu0 %494
          %496 = vadd.xlane.f32.xlu0 %v456
          %v497 = vpop.xlane.xlu0 %496
          %498 = vadd.xlane.f32.xlu0 %v457
          %v499 = vpop.xlane.xlu0 %498
          %500 = vadd.xlane.f32.xlu0 %v458
          %v501 = vpop.xlane.xlu0 %500
          %502 = vadd.xlane.f32.xlu0 %v459
          %v503 = vpop.xlane.xlu0 %502
          %504 = vadd.xlane.f32.xlu0 %v460
          %v505 = vpop.xlane.xlu0 %504
          %506 = vadd.xlane.f32.xlu0 %v461
          %v507 = vpop.xlane.xlu0 %506
          %508 = vadd.xlane.f32.xlu0 %v462
          %v509 = vpop.xlane.xlu0 %508
          %510 = vadd.xlane.f32.xlu0 %v463
          %v511 = vpop.xlane.xlu0 %510
          %512 = vadd.xlane.f32.xlu0 %v464
          %v513 = vpop.xlane.xlu0 %512
          %514 = vadd.xlane.f32.xlu0 %v465
          %v515 = vpop.xlane.xlu0 %514
          %516 = vadd.xlane.f32.xlu0 %v466
          %v517 = vpop.xlane.xlu0 %516
          %518 = vadd.xlane.f32.xlu0 %v467
          %v519 = vpop.xlane.xlu0 %518
          %520 = vadd.xlane.f32.xlu0 %v468
          %v521 = vpop.xlane.xlu0 %520
          %522 = vadd.xlane.f32.xlu0 %v469
          %v523 = vpop.xlane.xlu0 %522
          %524 = vadd.xlane.f32.xlu0 %v470
          %v525 = vpop.xlane.xlu0 %524
          %526 = vadd.xlane.f32.xlu0 %v471
          %v527 = vpop.xlane.xlu0 %526
          %528 = vadd.xlane.f32.xlu0 %v472
          %v529 = vpop.xlane.xlu0 %528
          %530 = vadd.xlane.f32.xlu0 %v473
          %v531 = vpop.xlane.xlu0 %530
          %532 = vadd.xlane.f32.xlu0 %v474
          %v533 = vpop.xlane.xlu0 %532
          %534 = vadd.xlane.f32.xlu0 %v475
          %v535 = vpop.xlane.xlu0 %534
          %536 = vadd.xlane.f32.xlu0 %v476
          %v537 = vpop.xlane.xlu0 %536
          %538 = vadd.xlane.f32.xlu0 %v477
          %v539 = vpop.xlane.xlu0 %538
          %540 = vadd.xlane.f32.xlu0 %v478
          %v541 = vpop.xlane.xlu0 %540
          %542 = vadd.xlane.f32.xlu0 %v479
          %v543 = vpop.xlane.xlu0 %542
          %v544 = vmul.f32 %v481, %v415
          %v545 = vmul.f32 %v483, %v415
          %v546 = vmul.f32 %v485, %v415
          %v547 = vmul.f32 %v487, %v415
          %v548 = vmul.f32 %v489, %v415
          %v549 = vmul.f32 %v491, %v415
          %v550 = vmul.f32 %v493, %v415
          %v551 = vmul.f32 %v495, %v415
          %v552 = vmul.f32 %v497, %v415
          %v553 = vmul.f32 %v499, %v415
          %v554 = vmul.f32 %v501, %v415
          %v555 = vmul.f32 %v503, %v415
          %v556 = vmul.f32 %v505, %v415
          %v557 = vmul.f32 %v507, %v415
          %v558 = vmul.f32 %v509, %v415
          %v559 = vmul.f32 %v511, %v415
          %v560 = vmul.f32 %v513, %v415
          %v561 = vmul.f32 %v515, %v415
          %v562 = vmul.f32 %v517, %v415
          %v563 = vmul.f32 %v519, %v415
          %v564 = vmul.f32 %v521, %v415
          %v565 = vmul.f32 %v523, %v415
          %v566 = vmul.f32 %v525, %v415
          %v567 = vmul.f32 %v527, %v415
          %v568 = vmul.f32 %v529, %v415
          %v569 = vmul.f32 %v531, %v415
          %v570 = vmul.f32 %v533, %v415
          %v571 = vmul.f32 %v535, %v415
          %v572 = vmul.f32 %v537, %v415
          %v573 = vmul.f32 %v539, %v415
          %v574 = vmul.f32 %v541, %v415
          %v575 = vmul.f32 %v543, %v415
          %v576 = vmul.f32 %v416, %v416
          %v577 = vmul.f32 %v417, %v417
          %v578 = vmul.f32 %v418, %v418
          %v579 = vmul.f32 %v419, %v419
          %v580 = vmul.f32 %v420, %v420
          %v581 = vmul.f32 %v421, %v421
          %v582 = vmul.f32 %v422, %v422
          %v583 = vmul.f32 %v423, %v423
          %v584 = vmul.f32 %v424, %v424
          %v585 = vmul.f32 %v425, %v425
          %v586 = vmul.f32 %v426, %v426
          %v587 = vmul.f32 %v427, %v427
          %v588 = vmul.f32 %v428, %v428
          %v589 = vmul.f32 %v429, %v429
          %v590 = vmul.f32 %v430, %v430
          %v591 = vmul.f32 %v431, %v431
          %v592 = vmul.f32 %v432, %v432
          %v593 = vmul.f32 %v433, %v433
          %v594 = vmul.f32 %v434, %v434
          %v595 = vmul.f32 %v435, %v435
          %v596 = vmul.f32 %v436, %v436
          %v597 = vmul.f32 %v437, %v437
          %v598 = vmul.f32 %v438, %v438
          %v599 = vmul.f32 %v439, %v439
          %v600 = vmul.f32 %v440, %v440
          %v601 = vmul.f32 %v441, %v441
          %v602 = vmul.f32 %v442, %v442
          %v603 = vmul.f32 %v443, %v443
          %v604 = vmul.f32 %v444, %v444
          %v605 = vmul.f32 %v445, %v445
          %v606 = vmul.f32 %v446, %v446
          %v607 = vmul.f32 %v447, %v447
          %v608 = vsub.f32 %v544, %v576
          %v609 = vsub.f32 %v545, %v577
          %v610 = vsub.f32 %v546, %v578
          %v611 = vsub.f32 %v547, %v579
          %v612 = vsub.f32 %v548, %v580
          %v613 = vsub.f32 %v549, %v581
          %v614 = vsub.f32 %v550, %v582
          %v615 = vsub.f32 %v551, %v583
          %v616 = vsub.f32 %v552, %v584
          %v617 = vsub.f32 %v553, %v585
          %v618 = vsub.f32 %v554, %v586
          %v619 = vsub.f32 %v555, %v587
          %v620 = vsub.f32 %v556, %v588
          %v621 = vsub.f32 %v557, %v589
          %v622 = vsub.f32 %v558, %v590
          %v623 = vsub.f32 %v559, %v591
          %v624 = vsub.f32 %v560, %v592
          %v625 = vsub.f32 %v561, %v593
          %v626 = vsub.f32 %v562, %v594
          %v627 = vsub.f32 %v563, %v595
          %v628 = vsub.f32 %v564, %v596
          %v629 = vsub.f32 %v565, %v597
          %v630 = vsub.f32 %v566, %v598
          %v631 = vsub.f32 %v567, %v599
          %v632 = vsub.f32 %v568, %v600
          %v633 = vsub.f32 %v569, %v601
          %v634 = vsub.f32 %v570, %v602
          %v635 = vsub.f32 %v571, %v603
          %v636 = vsub.f32 %v572, %v604
          %v637 = vsub.f32 %v573, %v605
          %v638 = vsub.f32 %v574, %v606
          %v639 = vsub.f32 %v575, %v607
          %v640 = vsub.f32 %v319, %v416
          %v641 = vsub.f32 %v320, %v417
          %v642 = vsub.f32 %v321, %v418
          %v643 = vsub.f32 %v322, %v419
          %v644 = vsub.f32 %v323, %v420
          %v645 = vsub.f32 %v324, %v421
          %v646 = vsub.f32 %v325, %v422
          %v647 = vsub.f32 %v326, %v423
          %v648 = vsub.f32 %v327, %v424
          %v649 = vsub.f32 %v328, %v425
          %v650 = vsub.f32 %v329, %v426
          %v651 = vsub.f32 %v330, %v427
          %v652 = vsub.f32 %v331, %v428
          %v653 = vsub.f32 %v332, %v429
          %v654 = vsub.f32 %v333, %v430
          %v655 = vsub.f32 %v334, %v431
          %v656 = vsub.f32 %v335, %v432
          %v657 = vsub.f32 %v336, %v433
          %v658 = vsub.f32 %v337, %v434
          %v659 = vsub.f32 %v338, %v435
          %v660 = vsub.f32 %v339, %v436
          %v661 = vsub.f32 %v340, %v437
          %v662 = vsub.f32 %v341, %v438
          %v663 = vsub.f32 %v342, %v439
          %v664 = vsub.f32 %v343, %v440
          %v665 = vsub.f32 %v344, %v441
          %v666 = vsub.f32 %v345, %v442
          %v667 = vsub.f32 %v346, %v443
          %v668 = vsub.f32 %v347, %v444
          %v669 = vsub.f32 %v348, %v445
          %v670 = vsub.f32 %v349, %v446
          %v671 = vsub.f32 %v350, %v447
          %v672 = vadd.f32 %v608, 1e-05
          %v673 = vadd.f32 %v609, 1e-05
          %v674 = vadd.f32 %v610, 1e-05
          %v675 = vadd.f32 %v611, 1e-05
          %v676 = vadd.f32 %v612, 1e-05
          %v677 = vadd.f32 %v613, 1e-05
          %v678 = vadd.f32 %v614, 1e-05
          %v679 = vadd.f32 %v615, 1e-05
          %v680 = vadd.f32 %v616, 1e-05
          %v681 = vadd.f32 %v617, 1e-05
          %v682 = vadd.f32 %v618, 1e-05
          %v683 = vadd.f32 %v619, 1e-05
          %v684 = vadd.f32 %v620, 1e-05
          %v685 = vadd.f32 %v621, 1e-05
          %v686 = vadd.f32 %v622, 1e-05
          %v687 = vadd.f32 %v623, 1e-05
          %v688 = vadd.f32 %v624, 1e-05
          %v689 = vadd.f32 %v625, 1e-05
          %v690 = vadd.f32 %v626, 1e-05
          %v691 = vadd.f32 %v627, 1e-05
          %v692 = vadd.f32 %v628, 1e-05
          %v693 = vadd.f32 %v629, 1e-05
          %v694 = vadd.f32 %v630, 1e-05
          %v695 = vadd.f32 %v631, 1e-05
          %v696 = vadd.f32 %v632, 1e-05
          %v697 = vadd.f32 %v633, 1e-05
          %v698 = vadd.f32 %v634, 1e-05
          %v699 = vadd.f32 %v635, 1e-05
          %v700 = vadd.f32 %v636, 1e-05
          %v701 = vadd.f32 %v637, 1e-05
          %v702 = vadd.f32 %v638, 1e-05
          %v703 = vadd.f32 %v639, 1e-05
          %v704 = vrsqrt.pop %v672
          %v705 = vrsqrt.pop %v673
          %v706 = vrsqrt.pop %v674
          %v707 = vrsqrt.pop %v675
          %v708 = vrsqrt.pop %v676
          %v709 = vrsqrt.pop %v677
          %v710 = vrsqrt.pop %v678
          %v711 = vrsqrt.pop %v679
          %v712 = vrsqrt.pop %v680
          %v713 = vrsqrt.pop %v681
          %v714 = vrsqrt.pop %v682
          %v715 = vrsqrt.pop %v683
          %v716 = vrsqrt.pop %v684
          %v717 = vrsqrt.pop %v685
          %v718 = vrsqrt.pop %v686
          %v719 = vrsqrt.pop %v687
          %v720 = vrsqrt.pop %v688
          %v721 = vrsqrt.pop %v689
          %v722 = vrsqrt.pop %v690
          %v723 = vrsqrt.pop %v691
          %v724 = vrsqrt.pop %v692
          %v725 = vrsqrt.pop %v693
          %v726 = vrsqrt.pop %v694
          %v727 = vrsqrt.pop %v695
          %v728 = vrsqrt.pop %v696
          %v729 = vrsqrt.pop %v697
          %v730 = vrsqrt.pop %v698
          %v731 = vrsqrt.pop %v699
          %v732 = vrsqrt.pop %v700
          %v733 = vrsqrt.pop %v701
          %v734 = vrsqrt.pop %v702
          %v735 = vrsqrt.pop %v703
          %v736 = vmul.f32 %v640, %v704
          %v737 = vmul.f32 %v641, %v705
          %v738 = vmul.f32 %v642, %v706
          %v739 = vmul.f32 %v643, %v707
          %v740 = vmul.f32 %v644, %v708
          %v741 = vmul.f32 %v645, %v709
          %v742 = vmul.f32 %v646, %v710
          %v743 = vmul.f32 %v647, %v711
          %v744 = vmul.f32 %v648, %v712
          %v745 = vmul.f32 %v649, %v713
          %v746 = vmul.f32 %v650, %v714
          %v747 = vmul.f32 %v651, %v715
          %v748 = vmul.f32 %v652, %v716
          %v749 = vmul.f32 %v653, %v717
          %v750 = vmul.f32 %v654, %v718
          %v751 = vmul.f32 %v655, %v719
          %v752 = vmul.f32 %v656, %v720
          %v753 = vmul.f32 %v657, %v721
          %v754 = vmul.f32 %v658, %v722
          %v755 = vmul.f32 %v659, %v723
          %v756 = vmul.f32 %v660, %v724
          %v757 = vmul.f32 %v661, %v725
          %v758 = vmul.f32 %v662, %v726
          %v759 = vmul.f32 %v663, %v727
          %v760 = vmul.f32 %v664, %v728
          %v761 = vmul.f32 %v665, %v729
          %v762 = vmul.f32 %v666, %v730
          %v763 = vmul.f32 %v667, %v731
          %v764 = vmul.f32 %v668, %v732
          %v765 = vmul.f32 %v669, %v733
          %v766 = vmul.f32 %v670, %v734
          %v767 = vmul.f32 %v671, %v735
          %v768 = vld [vmem:[%s1] sm:$0x1]
          %v770 = vlaneseq
          %v771 = vshrl.u32 %v770, 7
          %v772 = vsub.s32 0, %v771
          %v773 = vrot.slane %v768, %v772
          %v775 = vmul.f32 %v736, %v773
          %v776 = vmul.f32 %v737, %v773
          %v777 = vmul.f32 %v738, %v773
          %v778 = vmul.f32 %v739, %v773
          %v779 = vmul.f32 %v740, %v773
          %v780 = vmul.f32 %v741, %v773
          %v781 = vmul.f32 %v742, %v773
          %v782 = vmul.f32 %v743, %v773
          %v783 = vmul.f32 %v744, %v773
          %v784 = vmul.f32 %v745, %v773
          %v785 = vmul.f32 %v746, %v773
          %v786 = vmul.f32 %v747, %v773
          %v787 = vmul.f32 %v748, %v773
          %v788 = vmul.f32 %v749, %v773
          %v789 = vmul.f32 %v750, %v773
          %v790 = vmul.f32 %v751, %v773
          %v791 = vmul.f32 %v752, %v773
          %v792 = vmul.f32 %v753, %v773
          %v793 = vmul.f32 %v754, %v773
          %v794 = vmul.f32 %v755, %v773
          %v795 = vmul.f32 %v756, %v773
          %v796 = vmul.f32 %v757, %v773
          %v797 = vmul.f32 %v758, %v773
          %v798 = vmul.f32 %v759, %v773
          %v799 = vmul.f32 %v760, %v773
          %v800 = vmul.f32 %v761, %v773
          %v801 = vmul.f32 %v762, %v773
          %v802 = vmul.f32 %v763, %v773
          %v803 = vmul.f32 %v764, %v773
          %v804 = vmul.f32 %v765, %v773
          %v805 = vmul.f32 %v766, %v773
          %v806 = vmul.f32 %v767, %v773
          %v807 = vld [vmem:[#allocation6] sm:$0x1]
          %v809 = vlaneseq
          %v810 = vshrl.u32 %v809, 7
          %v811 = vsub.s32 0, %v810
          %v812 = vrot.slane %v807, %v811
          %v814 = vadd.f32 %v775, %v812
          %v815 = vadd.f32 %v776, %v812
          %v816 = vadd.f32 %v777, %v812
          %v817 = vadd.f32 %v778, %v812
          %v818 = vadd.f32 %v779, %v812
          %v819 = vadd.f32 %v780, %v812
          %v820 = vadd.f32 %v781, %v812
          %v821 = vadd.f32 %v782, %v812
          %v822 = vadd.f32 %v783, %v812
          %v823 = vadd.f32 %v784, %v812
          %v824 = vadd.f32 %v785, %v812
          %v825 = vadd.f32 %v786, %v812
          %v826 = vadd.f32 %v787, %v812
          %v827 = vadd.f32 %v788, %v812
          %v828 = vadd.f32 %v789, %v812
          %v829 = vadd.f32 %v790, %v812
          %v830 = vadd.f32 %v791, %v812
          %v831 = vadd.f32 %v792, %v812
          %v832 = vadd.f32 %v793, %v812
          %v833 = vadd.f32 %v794, %v812
          %v834 = vadd.f32 %v795, %v812
          %v835 = vadd.f32 %v796, %v812
          %v836 = vadd.f32 %v797, %v812
          %v837 = vadd.f32 %v798, %v812
          %v838 = vadd.f32 %v799, %v812
          %v839 = vadd.f32 %v800, %v812
          %v840 = vadd.f32 %v801, %v812
          %v841 = vadd.f32 %v802, %v812
          %v842 = vadd.f32 %v803, %v812
          %v843 = vadd.f32 %v804, %v812
          %v844 = vadd.f32 %v805, %v812
          %v845 = vadd.f32 %v806, %v812
          %846 = vst [vmem:[#allocation2] sm:$0xff] %v814
          %847 = vst [vmem:[#allocation2 + $0x8] sm:$0xff] %v815
          %848 = vst [vmem:[#allocation2 + $0x10] sm:$0xff] %v816
          %849 = vst [vmem:[#allocation2 + $0x18] sm:$0xff] %v817
          %850 = vst [vmem:[#allocation2 + $0x20] sm:$0xff] %v818
          %851 = vst [vmem:[#allocation2 + $0x28] sm:$0xff] %v819
          %852 = vst [vmem:[#allocation2 + $0x30] sm:$0xff] %v820
          %853 = vst [vmem:[#allocation2 + $0x38] sm:$0xff] %v821
          %854 = vst [vmem:[#allocation2 + $0x40] sm:$0xff] %v822
          %855 = vst [vmem:[#allocation2 + $0x48] sm:$0xff] %v823
          %856 = vst [vmem:[#allocation2 + $0x50] sm:$0xff] %v824
          %857 = vst [vmem:[#allocation2 + $0x58] sm:$0xff] %v825
          %858 = vst [vmem:[#allocation2 + $0x60] sm:$0xff] %v826
          %859 = vst [vmem:[#allocation2 + $0x68] sm:$0xff] %v827
          %860 = vst [vmem:[#allocation2 + $0x70] sm:$0xff] %v828
          %861 = vst [vmem:[#allocation2 + $0x78] sm:$0xff] %v829
          %862 = vst [vmem:[#allocation2 + $0x80] sm:$0xff] %v830
          %863 = vst [vmem:[#allocation2 + $0x88] sm:$0xff] %v831
          %864 = vst [vmem:[#allocation2 + $0x90] sm:$0xff] %v832
          %865 = vst [vmem:[#allocation2 + $0x98] sm:$0xff] %v833
          %866 = vst [vmem:[#allocation2 + $0xa0] sm:$0xff] %v834
          %867 = vst [vmem:[#allocation2 + $0xa8] sm:$0xff] %v835
          %868 = vst [vmem:[#allocation2 + $0xb0] sm:$0xff] %v836
          %869 = vst [vmem:[#allocation2 + $0xb8] sm:$0xff] %v837
          %870 = vst [vmem:[#allocation2 + $0xc0] sm:$0xff] %v838
          %871 = vst [vmem:[#allocation2 + $0xc8] sm:$0xff] %v839
          %872 = vst [vmem:[#allocation2 + $0xd0] sm:$0xff] %v840
          %873 = vst [vmem:[#allocation2 + $0xd8] sm:$0xff] %v841
          %874 = vst [vmem:[#allocation2 + $0xe0] sm:$0xff] %v842
          %875 = vst [vmem:[#allocation2 + $0xe8] sm:$0xff] %v843
          %876 = vst [vmem:[#allocation2 + $0xf0] sm:$0xff] %v844
          %877 = vst [vmem:[#allocation2 + $0xf8] sm:$0xff] %v845
        $region56: #{tpu_custom_call.1} parent=39 // pred_fallthru
          _
        %v878 = vld [vmem:[#allocation2] sm:$0xff]
        %v879 = vld [vmem:[#allocation2 + $0x8] sm:$0xff]
        %v880 = vld [vmem:[#allocation2 + $0x10] sm:$0xff]
        %v881 = vld [vmem:[#allocation2 + $0x18] sm:$0xff]
        %v882 = vld [vmem:[#allocation2 + $0x20] sm:$0xff]
        %v883 = vld [vmem:[#allocation2 + $0x28] sm:$0xff]
        %v884 = vld [vmem:[#allocation2 + $0x30] sm:$0xff]
        %v885 = vld [vmem:[#allocation2 + $0x38] sm:$0xff]
        %v886 = vld [vmem:[#allocation2 + $0x40] sm:$0xff]
        %v887 = vld [vmem:[#allocation2 + $0x48] sm:$0xff]
        %v888 = vld [vmem:[#allocation2 + $0x50] sm:$0xff]
        %v889 = vld [vmem:[#allocation2 + $0x58] sm:$0xff]
        %v890 = vld [vmem:[#allocation2 + $0x60] sm:$0xff]
        %v891 = vld [vmem:[#allocation2 + $0x68] sm:$0xff]
        %v892 = vld [vmem:[#allocation2 + $0x70] sm:$0xff]
        %v893 = vld [vmem:[#allocation2 + $0x78] sm:$0xff]
        %v894 = vld [vmem:[#allocation2 + $0x80] sm:$0xff]
        %v895 = vld [vmem:[#allocation2 + $0x88] sm:$0xff]
        %v896 = vld [vmem:[#allocation2 + $0x90] sm:$0xff]
        %v897 = vld [vmem:[#allocation2 + $0x98] sm:$0xff]
        %v898 = vld [vmem:[#allocation2 + $0xa0] sm:$0xff]
        %v899 = vld [vmem:[#allocation2 + $0xa8] sm:$0xff]
        %v900 = vld [vmem:[#allocation2 + $0xb0] sm:$0xff]
        %v901 = vld [vmem:[#allocation2 + $0xb8] sm:$0xff]
        %v902 = vld [vmem:[#allocation2 + $0xc0] sm:$0xff]
        %v903 = vld [vmem:[#allocation2 + $0xc8] sm:$0xff]
        %v904 = vld [vmem:[#allocation2 + $0xd0] sm:$0xff]
        %v905 = vld [vmem:[#allocation2 + $0xd8] sm:$0xff]
        %v906 = vld [vmem:[#allocation2 + $0xe0] sm:$0xff]
        %v907 = vld [vmem:[#allocation2 + $0xe8] sm:$0xff]
        %v908 = vld [vmem:[#allocation2 + $0xf0] sm:$0xff]
        %v909 = vld [vmem:[#allocation2 + $0xf8] sm:$0xff]
        %v910 = vld [vmem:[#allocation8] sm:$0xff]
        %v911 = vld [vmem:[#allocation8 + $0x8] sm:$0xff]
        %v912 = vld [vmem:[#allocation8 + $0x10] sm:$0xff]
        %v913 = vld [vmem:[#allocation8 + $0x18] sm:$0xff]
        %v914 = vld [vmem:[#allocation8 + $0x20] sm:$0xff]
        %v915 = vld [vmem:[#allocation8 + $0x28] sm:$0xff]
        %v916 = vld [vmem:[#allocation8 + $0x30] sm:$0xff]
        %v917 = vld [vmem:[#allocation8 + $0x38] sm:$0xff]
        %v918 = vld [vmem:[#allocation8 + $0x40] sm:$0xff]
        %v919 = vld [vmem:[#allocation8 + $0x48] sm:$0xff]
        %v920 = vld [vmem:[#allocation8 + $0x50] sm:$0xff]
        %v921 = vld [vmem:[#allocation8 + $0x58] sm:$0xff]
        %v922 = vld [vmem:[#allocation8 + $0x60] sm:$0xff]
        %v923 = vld [vmem:[#allocation8 + $0x68] sm:$0xff]
        %v924 = vld [vmem:[#allocation8 + $0x70] sm:$0xff]
        %v925 = vld [vmem:[#allocation8 + $0x78] sm:$0xff]
        %v926 = vld [vmem:[#allocation8 + $0x80] sm:$0xff]
        %v927 = vld [vmem:[#allocation8 + $0x88] sm:$0xff]
        %v928 = vld [vmem:[#allocation8 + $0x90] sm:$0xff]
        %v929 = vld [vmem:[#allocation8 + $0x98] sm:$0xff]
        %v930 = vld [vmem:[#allocation8 + $0xa0] sm:$0xff]
        %v931 = vld [vmem:[#allocation8 + $0xa8] sm:$0xff]
        %v932 = vld [vmem:[#allocation8 + $0xb0] sm:$0xff]
        %v933 = vld [vmem:[#allocation8 + $0xb8] sm:$0xff]
        %v934 = vld [vmem:[#allocation8 + $0xc0] sm:$0xff]
        %v935 = vld [vmem:[#allocation8 + $0xc8] sm:$0xff]
        %v936 = vld [vmem:[#allocation8 + $0xd0] sm:$0xff]
        %v937 = vld [vmem:[#allocation8 + $0xd8] sm:$0xff]
        %v938 = vld [vmem:[#allocation8 + $0xe0] sm:$0xff]
        %v939 = vld [vmem:[#allocation8 + $0xe8] sm:$0xff]
        %v940 = vld [vmem:[#allocation8 + $0xf0] sm:$0xff]
        %v941 = vld [vmem:[#allocation8 + $0xf8] sm:$0xff]
        %v942 = vld [vmem:[%s311] sm:$0x3]
        %v944 = vlaneseq
        %v945 = vshrl.u32 %v944, 7
        %v946 = vsub.s32 0, %v945
        %v947 = vrot.slane %v942, %v946
        %v948 = vlaneseq
        %v949 = vshrl.u32 %v948, 7
        %v950 = vsub.s32 1, %v949
        %v951 = vrot.slane %v942, %v950
        %954 = vmatprep.subr.mxu0 %v941
        %955 = vmatpush1.msra.mxu0 %v940
        %956 = vmatprep.subr.mxu0 %v939
        %957 = vmatpush1.msra.mxu0 %v938
        %958 = vmatprep.subr.mxu0 %v937
        %959 = vmatpush1.msra.mxu0 %v936
        %960 = vmatprep.subr.mxu0 %v935
        %961 = vmatpush1.msra.mxu0 %v934
        %962 = vmatprep.subr.mxu0 %v933
        %963 = vmatpush1.msra.mxu0 %v932
        %964 = vmatprep.subr.mxu0 %v931
        %965 = vmatpush1.msra.mxu0 %v930
        %966 = vmatprep.subr.mxu0 %v929
        %967 = vmatpush1.msra.mxu0 %v928
        %968 = vmatprep.subr.mxu0 %v927
        %969 = vmatpush1.msra.mxu0 %v926
        %970 = vmatprep.subr.mxu0 %v925
        %971 = vmatpush1.msra.mxu0 %v924
        %972 = vmatprep.subr.mxu0 %v923
        %973 = vmatpush1.msra.mxu0 %v922
        %974 = vmatprep.subr.mxu0 %v921
        %975 = vmatpush1.msra.mxu0 %v920
        %976 = vmatprep.subr.mxu0 %v919
        %977 = vmatpush1.msra.mxu0 %v918
        %978 = vmatprep.subr.mxu0 %v917
        %979 = vmatpush1.msra.mxu0 %v916
        %980 = vmatprep.subr.mxu0 %v915
        %981 = vmatpush1.msra.mxu0 %v914
        %982 = vmatprep.subr.mxu0 %v913
        %983 = vmatpush1.msra.mxu0 %v912
        %984 = vmatprep.subr.mxu0 %v911
        %985 = vmatpush1.msra.mxu0 %v910
        %986 = vmatprep.subr.mxu0 0.0
        %987 = vmatpush2.msra.mxu0 0.0
        %988 = vmatprep.subr.mxu0 0.0
        %989 = vmatpush2.msra.mxu0 0.0
        %990 = vmatprep.subr.mxu0 0.0
        %991 = vmatpush2.msra.mxu0 0.0
        %992 = vmatprep.subr.mxu0 0.0
        %993 = vmatpush2.msra.mxu0 0.0
        %994 = vmatprep.subr.mxu0 0.0
        %995 = vmatpush2.msra.mxu0 0.0
        %996 = vmatprep.subr.mxu0 0.0
        %997 = vmatpush2.msra.mxu0 0.0
        %998 = vmatprep.subr.mxu0 0.0
        %999 = vmatpush2.msra.mxu0 0.0
        %1000 = vmatprep.subr.mxu0 0.0
        %1001 = vmatpush2.msra.mxu0 0.0
        %1002 = vmatprep.subr.mxu0 0.0
        %1003 = vmatpush2.msra.mxu0 0.0
        %1004 = vmatprep.subr.mxu0 0.0
        %1005 = vmatpush2.msra.mxu0 0.0
        %1006 = vmatprep.subr.mxu0 0.0
        %1007 = vmatpush2.msra.mxu0 0.0
        %1008 = vmatprep.subr.mxu0 0.0
        %1009 = vmatpush2.msra.mxu0 0.0
        %1010 = vmatprep.subr.mxu0 0.0
        %1011 = vmatpush2.msra.mxu0 0.0
        %1012 = vmatprep.subr.mxu0 0.0
        %1013 = vmatpush2.msra.mxu0 0.0
        %1014 = vmatprep.subr.mxu0 0.0
        %1015 = vmatpush2.msra.mxu0 0.0
        %1016 = vmatprep.subr.mxu0 0.0
        %1017 = vmatpush2.msra.mxu0 0.0
        %1018 = vmatprep.mubr.f32.mxu0 0.0
        %1019 = vmatmul.mubr.f32.gmra.mxu0 %v878
        %v1020 = vpop.f32.mrf.mxu0
        %v1021 = vadd.f32 %v947, %v1020
        %v1022 = vpop.f32.mrf.mxu0
        %v1023 = vadd.f32 %v951, %v1022
        %1024 = vmatprep.mubr.f32.mxu0 0.0
        %1025 = vmatmul.mubr.f32.gmra.mxu0 %v879
        %v1026 = vpop.f32.mrf.mxu0
        %v1027 = vadd.f32 %v947, %v1026
        %v1028 = vpop.f32.mrf.mxu0
        %v1029 = vadd.f32 %v951, %v1028
        %1030 = vmatprep.mubr.f32.mxu0 0.0
        %1031 = vmatmul.mubr.f32.gmra.mxu0 %v880
        %v1032 = vpop.f32.mrf.mxu0
        %v1033 = vadd.f32 %v947, %v1032
        %v1034 = vpop.f32.mrf.mxu0
        %v1035 = vadd.f32 %v951, %v1034
        %1036 = vmatprep.mubr.f32.mxu0 0.0
        %1037 = vmatmul.mubr.f32.gmra.mxu0 %v881
        %v1038 = vpop.f32.mrf.mxu0
        %v1039 = vadd.f32 %v947, %v1038
        %v1040 = vpop.f32.mrf.mxu0
        %v1041 = vadd.f32 %v951, %v1040
        %1042 = vmatprep.mubr.f32.mxu0 0.0
        %1043 = vmatmul.mubr.f32.gmra.mxu0 %v882
        %v1044 = vpop.f32.mrf.mxu0
        %v1045 = vadd.f32 %v947, %v1044
        %v1046 = vpop.f32.mrf.mxu0
        %v1047 = vadd.f32 %v951, %v1046
        %1048 = vmatprep.mubr.f32.mxu0 0.0
        %1049 = vmatmul.mubr.f32.gmra.mxu0 %v883
        %v1050 = vpop.f32.mrf.mxu0
        %v1051 = vadd.f32 %v947, %v1050
        %v1052 = vpop.f32.mrf.mxu0
        %v1053 = vadd.f32 %v951, %v1052
        %1054 = vmatprep.mubr.f32.mxu0 0.0
        %1055 = vmatmul.mubr.f32.gmra.mxu0 %v884
        %v1056 = vpop.f32.mrf.mxu0
        %v1057 = vadd.f32 %v947, %v1056
        %v1058 = vpop.f32.mrf.mxu0
        %v1059 = vadd.f32 %v951, %v1058
        %1060 = vmatprep.mubr.f32.mxu0 0.0
        %1061 = vmatmul.mubr.f32.gmra.mxu0 %v885
        %v1062 = vpop.f32.mrf.mxu0
        %v1063 = vadd.f32 %v947, %v1062
        %v1064 = vpop.f32.mrf.mxu0
        %v1065 = vadd.f32 %v951, %v1064
        %1066 = vmatprep.mubr.f32.mxu0 0.0
        %1067 = vmatmul.mubr.f32.gmra.mxu0 %v886
        %v1068 = vpop.f32.mrf.mxu0
        %v1069 = vadd.f32 %v947, %v1068
        %v1070 = vpop.f32.mrf.mxu0
        %v1071 = vadd.f32 %v951, %v1070
        %1072 = vmatprep.mubr.f32.mxu0 0.0
        %1073 = vmatmul.mubr.f32.gmra.mxu0 %v887
        %v1074 = vpop.f32.mrf.mxu0
        %v1075 = vadd.f32 %v947, %v1074
        %v1076 = vpop.f32.mrf.mxu0
        %v1077 = vadd.f32 %v951, %v1076
        %1078 = vmatprep.mubr.f32.mxu0 0.0
        %1079 = vmatmul.mubr.f32.gmra.mxu0 %v888
        %v1080 = vpop.f32.mrf.mxu0
        %v1081 = vadd.f32 %v947, %v1080
        %v1082 = vpop.f32.mrf.mxu0
        %v1083 = vadd.f32 %v951, %v1082
        %1084 = vmatprep.mubr.f32.mxu0 0.0
        %1085 = vmatmul.mubr.f32.gmra.mxu0 %v889
        %v1086 = vpop.f32.mrf.mxu0
        %v1087 = vadd.f32 %v947, %v1086
        %v1088 = vpop.f32.mrf.mxu0
        %v1089 = vadd.f32 %v951, %v1088
        %1090 = vmatprep.mubr.f32.mxu0 0.0
        %1091 = vmatmul.mubr.f32.gmra.mxu0 %v890
        %v1092 = vpop.f32.mrf.mxu0
        %v1093 = vadd.f32 %v947, %v1092
        %v1094 = vpop.f32.mrf.mxu0
        %v1095 = vadd.f32 %v951, %v1094
        %1096 = vmatprep.mubr.f32.mxu0 0.0
        %1097 = vmatmul.mubr.f32.gmra.mxu0 %v891
        %v1098 = vpop.f32.mrf.mxu0
        %v1099 = vadd.f32 %v947, %v1098
        %v1100 = vpop.f32.mrf.mxu0
        %v1101 = vadd.f32 %v951, %v1100
        %1102 = vmatprep.mubr.f32.mxu0 0.0
        %1103 = vmatmul.mubr.f32.gmra.mxu0 %v892
        %v1104 = vpop.f32.mrf.mxu0
        %v1105 = vadd.f32 %v947, %v1104
        %v1106 = vpop.f32.mrf.mxu0
        %v1107 = vadd.f32 %v951, %v1106
        %1108 = vmatprep.mubr.f32.mxu0 0.0
        %1109 = vmatmul.mubr.f32.gmra.mxu0 %v893
        %v1110 = vpop.f32.mrf.mxu0
        %v1111 = vadd.f32 %v947, %v1110
        %v1112 = vpop.f32.mrf.mxu0
        %v1113 = vadd.f32 %v951, %v1112
        %1114 = vmatprep.mubr.f32.mxu0 0.0
        %1115 = vmatmul.mubr.f32.gmra.mxu0 %v894
        %v1116 = vpop.f32.mrf.mxu0
        %v1117 = vadd.f32 %v947, %v1116
        %v1118 = vpop.f32.mrf.mxu0
        %v1119 = vadd.f32 %v951, %v1118
        %1120 = vmatprep.mubr.f32.mxu0 0.0
        %1121 = vmatmul.mubr.f32.gmra.mxu0 %v895
        %v1122 = vpop.f32.mrf.mxu0
        %v1123 = vadd.f32 %v947, %v1122
        %v1124 = vpop.f32.mrf.mxu0
        %v1125 = vadd.f32 %v951, %v1124
        %1126 = vmatprep.mubr.f32.mxu0 0.0
        %1127 = vmatmul.mubr.f32.gmra.mxu0 %v896
        %v1128 = vpop.f32.mrf.mxu0
        %v1129 = vadd.f32 %v947, %v1128
        %v1130 = vpop.f32.mrf.mxu0
        %v1131 = vadd.f32 %v951, %v1130
        %1132 = vmatprep.mubr.f32.mxu0 0.0
        %1133 = vmatmul.mubr.f32.gmra.mxu0 %v897
        %v1134 = vpop.f32.mrf.mxu0
        %v1135 = vadd.f32 %v947, %v1134
        %v1136 = vpop.f32.mrf.mxu0
        %v1137 = vadd.f32 %v951, %v1136
        %1138 = vmatprep.mubr.f32.mxu0 0.0
        %1139 = vmatmul.mubr.f32.gmra.mxu0 %v898
        %v1140 = vpop.f32.mrf.mxu0
        %v1141 = vadd.f32 %v947, %v1140
        %v1142 = vpop.f32.mrf.mxu0
        %v1143 = vadd.f32 %v951, %v1142
        %1144 = vmatprep.mubr.f32.mxu0 0.0
        %1145 = vmatmul.mubr.f32.gmra.mxu0 %v899
        %v1146 = vpop.f32.mrf.mxu0
        %v1147 = vadd.f32 %v947, %v1146
        %v1148 = vpop.f32.mrf.mxu0
        %v1149 = vadd.f32 %v951, %v1148
        %1150 = vmatprep.mubr.f32.mxu0 0.0
        %1151 = vmatmul.mubr.f32.gmra.mxu0 %v900
        %v1152 = vpop.f32.mrf.mxu0
        %v1153 = vadd.f32 %v947, %v1152
        %v1154 = vpop.f32.mrf.mxu0
        %v1155 = vadd.f32 %v951, %v1154
        %1156 = vmatprep.mubr.f32.mxu0 0.0
        %1157 = vmatmul.mubr.f32.gmra.mxu0 %v901
        %v1158 = vpop.f32.mrf.mxu0
        %v1159 = vadd.f32 %v947, %v1158
        %v1160 = vpop.f32.mrf.mxu0
        %v1161 = vadd.f32 %v951, %v1160
        %1162 = vmatprep.mubr.f32.mxu0 0.0
        %1163 = vmatmul.mubr.f32.gmra.mxu0 %v902
        %v1164 = vpop.f32.mrf.mxu0
        %v1165 = vadd.f32 %v947, %v1164
        %v1166 = vpop.f32.mrf.mxu0
        %v1167 = vadd.f32 %v951, %v1166
        %1168 = vmatprep.mubr.f32.mxu0 0.0
        %1169 = vmatmul.mubr.f32.gmra.mxu0 %v903
        %v1170 = vpop.f32.mrf.mxu0
        %v1171 = vadd.f32 %v947, %v1170
        %v1172 = vpop.f32.mrf.mxu0
        %v1173 = vadd.f32 %v951, %v1172
        %1174 = vmatprep.mubr.f32.mxu0 0.0
        %1175 = vmatmul.mubr.f32.gmra.mxu0 %v904
        %v1176 = vpop.f32.mrf.mxu0
        %v1177 = vadd.f32 %v947, %v1176
        %v1178 = vpop.f32.mrf.mxu0
        %v1179 = vadd.f32 %v951, %v1178
        %1180 = vmatprep.mubr.f32.mxu0 0.0
        %1181 = vmatmul.mubr.f32.gmra.mxu0 %v905
        %v1182 = vpop.f32.mrf.mxu0
        %v1183 = vadd.f32 %v947, %v1182
        %v1184 = vpop.f32.mrf.mxu0
        %v1185 = vadd.f32 %v951, %v1184
        %1186 = vmatprep.mubr.f32.mxu0 0.0
        %1187 = vmatmul.mubr.f32.gmra.mxu0 %v906
        %v1188 = vpop.f32.mrf.mxu0
        %v1189 = vadd.f32 %v947, %v1188
        %v1190 = vpop.f32.mrf.mxu0
        %v1191 = vadd.f32 %v951, %v1190
        %1192 = vmatprep.mubr.f32.mxu0 0.0
        %1193 = vmatmul.mubr.f32.gmra.mxu0 %v907
        %v1194 = vpop.f32.mrf.mxu0
        %v1195 = vadd.f32 %v947, %v1194
        %v1196 = vpop.f32.mrf.mxu0
        %v1197 = vadd.f32 %v951, %v1196
        %1198 = vmatprep.mubr.f32.mxu0 0.0
        %1199 = vmatmul.mubr.f32.gmra.mxu0 %v908
        %v1200 = vpop.f32.mrf.mxu0
        %v1201 = vadd.f32 %v947, %v1200
        %v1202 = vpop.f32.mrf.mxu0
        %v1203 = vadd.f32 %v951, %v1202
        %1204 = vmatprep.mubr.f32.mxu0 0.0
        %1205 = vmatmul.mubr.f32.gmra.mxu0 %v909
        %v1206 = vpop.f32.mrf.mxu0
        %v1207 = vadd.f32 %v947, %v1206
        %v1208 = vpop.f32.mrf.mxu0
        %v1209 = vadd.f32 %v951, %v1208
        %1210 = vdwg.mxu0
        %1211 = vst [vmem:[%s305] sm:$0xff] %v1021
        %1212 = vst [vmem:[%s305 + $0x8] sm:$0xff] %v1023
        %1213 = vst [vmem:[%s305 + $0x10] sm:$0xff] %v1027
        %1214 = vst [vmem:[%s305 + $0x18] sm:$0xff] %v1029
        %1215 = vst [vmem:[%s305 + $0x20] sm:$0xff] %v1033
        %1216 = vst [vmem:[%s305 + $0x28] sm:$0xff] %v1035
        %1217 = vst [vmem:[%s305 + $0x30] sm:$0xff] %v1039
        %1218 = vst [vmem:[%s305 + $0x38] sm:$0xff] %v1041
        %1219 = vst [vmem:[%s305 + $0x40] sm:$0xff] %v1045
        %1220 = vst [vmem:[%s305 + $0x48] sm:$0xff] %v1047
        %1221 = vst [vmem:[%s305 + $0x50] sm:$0xff] %v1051
        %1222 = vst [vmem:[%s305 + $0x58] sm:$0xff] %v1053
        %1223 = vst [vmem:[%s305 + $0x60] sm:$0xff] %v1057
        %1224 = vst [vmem:[%s305 + $0x68] sm:$0xff] %v1059
        %1225 = vst [vmem:[%s305 + $0x70] sm:$0xff] %v1063
        %1226 = vst [vmem:[%s305 + $0x78] sm:$0xff] %v1065
        %1227 = vst [vmem:[%s305 + $0x80] sm:$0xff] %v1069
        %1228 = vst [vmem:[%s305 + $0x88] sm:$0xff] %v1071
        %1229 = vst [vmem:[%s305 + $0x90] sm:$0xff] %v1075
        %1230 = vst [vmem:[%s305 + $0x98] sm:$0xff] %v1077
        %1231 = vst [vmem:[%s305 + $0xa0] sm:$0xff] %v1081
        %1232 = vst [vmem:[%s305 + $0xa8] sm:$0xff] %v1083
        %1233 = vst [vmem:[%s305 + $0xb0] sm:$0xff] %v1087
        %1234 = vst [vmem:[%s305 + $0xb8] sm:$0xff] %v1089
        %1235 = vst [vmem:[%s305 + $0xc0] sm:$0xff] %v1093
        %1236 = vst [vmem:[%s305 + $0xc8] sm:$0xff] %v1095
        %1237 = vst [vmem:[%s305 + $0xd0] sm:$0xff] %v1099
        %1238 = vst [vmem:[%s305 + $0xd8] sm:$0xff] %v1101
        %1239 = vst [vmem:[%s305 + $0xe0] sm:$0xff] %v1105
        %1240 = vst [vmem:[%s305 + $0xe8] sm:$0xff] %v1107
        %1241 = vst [vmem:[%s305 + $0xf0] sm:$0xff] %v1111
        %1242 = vst [vmem:[%s305 + $0xf8] sm:$0xff] %v1113
        %1243 = vst [vmem:[%s305 + $0x100] sm:$0xff] %v1117
        %1244 = vst [vmem:[%s305 + $0x108] sm:$0xff] %v1119
        %1245 = vst [vmem:[%s305 + $0x110] sm:$0xff] %v1123
        %1246 = vst [vmem:[%s305 + $0x118] sm:$0xff] %v1125
        %1247 = vst [vmem:[%s305 + $0x120] sm:$0xff] %v1129
        %1248 = vst [vmem:[%s305 + $0x128] sm:$0xff] %v1131
        %1249 = vst [vmem:[%s305 + $0x130] sm:$0xff] %v1135
        %1250 = vst [vmem:[%s305 + $0x138] sm:$0xff] %v1137
        %1251 = vst [vmem:[%s305 + $0x140] sm:$0xff] %v1141
        %1252 = vst [vmem:[%s305 + $0x148] sm:$0xff] %v1143
        %1253 = vst [vmem:[%s305 + $0x150] sm:$0xff] %v1147
        %1254 = vst [vmem:[%s305 + $0x158] sm:$0xff] %v1149
        %1255 = vst [vmem:[%s305 + $0x160] sm:$0xff] %v1153
        %1256 = vst [vmem:[%s305 + $0x168] sm:$0xff] %v1155
        %1257 = vst [vmem:[%s305 + $0x170] sm:$0xff] %v1159
        %1258 = vst [vmem:[%s305 + $0x178] sm:$0xff] %v1161
        %1259 = vst [vmem:[%s305 + $0x180] sm:$0xff] %v1165
        %1260 = vst [vmem:[%s305 + $0x188] sm:$0xff] %v1167
        %1261 = vst [vmem:[%s305 + $0x190] sm:$0xff] %v1171
        %1262 = vst [vmem:[%s305 + $0x198] sm:$0xff] %v1173
        %1263 = vst [vmem:[%s305 + $0x1a0] sm:$0xff] %v1177
        %1264 = vst [vmem:[%s305 + $0x1a8] sm:$0xff] %v1179
        %1265 = vst [vmem:[%s305 + $0x1b0] sm:$0xff] %v1183
        %1266 = vst [vmem:[%s305 + $0x1b8] sm:$0xff] %v1185
        %1267 = vst [vmem:[%s305 + $0x1c0] sm:$0xff] %v1189
        %1268 = vst [vmem:[%s305 + $0x1c8] sm:$0xff] %v1191
        %1269 = vst [vmem:[%s305 + $0x1d0] sm:$0xff] %v1195
        %1270 = vst [vmem:[%s305 + $0x1d8] sm:$0xff] %v1197
        %1271 = vst [vmem:[%s305 + $0x1e0] sm:$0xff] %v1201
        %1272 = vst [vmem:[%s305 + $0x1e8] sm:$0xff] %v1203
        %1273 = vst [vmem:[%s305 + $0x1f0] sm:$0xff] %v1207
        %1274 = vst [vmem:[%s305 + $0x1f8] sm:$0xff] %v1209
        %s1275 = sand.u32 %s165, 1
        %s1276 = scalar_lea.sflag [#allocation5], %s1275
        %s1277 = sand.u32 %s165, 1
        %s1278 = smul.addr %s1277, 512
        %s1279 = scalar_lea.vmem [#allocation9], %s1278
        // Predicated region
        $region57: #{tpu_custom_call.1} parent=39 // pred_check
          %p1280 = pneg %p175
        $region58: #{tpu_custom_call.1} parent=39 // pred_check_branch
          %1282 = sbr.rel (%p1280) target = $region60
        $region59: #{tpu_custom_call.1} parent=39 // pred_region
          %s1283 = smul.u32 32, %s27
          %s1284 = smul.u32 2, %s28
          %s1286 = ssub.s32 8192, 8192
          %1287 = vsyncadd %s1276, %s1286
          %s1288 = smul.addr %s1283, 2
          %s1289 = sadd.s32 %s1284, %s1288
          %s1290 = smul.addr %s1289, 128
          %s1291 = scalar_lea.hbm %s5, %s1290
          %s1292 = sshll.u32 %s1279, 4
          %s1293 = int_to_ptr.vmem [resolvable:$true] %s1292
          %1298 = dma.vmem_to_hbm [thread:$0]  %s1293, 8192, %s1291, %s1276, 256, 256, 16
        $region60: #{tpu_custom_call.1} parent=39 // pred_fallthru
          _
      $region40: #{tpu_custom_call.1} parent=5 // pred_fallthru
        _
      %p1299 = scmp.le.s32.totalorder 2, %s18
      // Predicated region
      $region61: #{tpu_custom_call.1} parent=5 // pred_check
        %p1300 = pneg %p1299
      $region62: #{tpu_custom_call.1} parent=5 // pred_check_branch
        %1302 = sbr.rel (%p1300) target = $region64
      $region63: #{tpu_custom_call.1} parent=5 // pred_region
        %s1303 = ssub.s32 %s18, 2
        // Predicated region
        $region65: #{tpu_custom_call.1} parent=63 // pred_check
          %p1304 = pneg %p181
        $region66: #{tpu_custom_call.1} parent=63 // pred_check_branch
          %1306 = sbr.rel (%p1304) target = $region68
        $region67: #{tpu_custom_call.1} parent=63 // pred_region
          %s1307 = sand.u32 %s166, 1
          %s1308 = scalar_lea.sflag [#allocation5], %s1307
          %s1309 = sand.u32 %s166, 1
          %s1310 = smul.addr %s1309, 512
          %s1311 = scalar_lea.vmem [#allocation9], %s1310
          %1312 = dma.done %s1308, 8192
        $region68: #{tpu_custom_call.1} parent=63 // pred_fallthru
          _
      $region64: #{tpu_custom_call.1} parent=5 // pred_fallthru
        _
    $region6: #{tpu_custom_call.1} parent=1 // loop_footer
      %s22 = sadd.s32 1, %s18
    $region7: #{tpu_custom_call.1} parent=1 // loop_footer_branch
      %17 = sbr.rel target = $region3
    $region8: #{tpu_custom_call.1} parent=1 // loop_exit
      _
    %1313 = vsyncpa [#allocation4], 1
    %s1314 = scalar_lea.sflag [#allocation4], 1
    %1315 = vsyncpa %s1314, 1
    %1316 = vsyncpa [#allocation7], 1
    %1317 = vsyncpa [#allocation5], 1
    %s1318 = scalar_lea.sflag [#allocation5], 1
    %1319 = vsyncpa %s1318, 1

</llo_original>
